<compile_context>
chip_gen: v7x
topology: tpu7x:2x2x1
jax: 0.10.0
libtpu: 0.0.40
codegen_flags: <defaults>
</compile_context>

<pallas_src>
import functools

import jax
import jax.numpy as jnp
from jax import lax
from jax.experimental import pallas as pl
from jax.experimental.pallas import tpu as pltpu


# Storage dtype for the intermediates between the fused Pallas stages.
_INTER_DTYPE = jnp.bfloat16


# ----------------------------- Pallas kernels --------------------------------

def _bn_relu_radixsum_kernel(c_out, radix, hw_true,
                             x_ref, scale_ref, shift_ref, y_ref, gsum_ref):
    """K1: y = relu(x*scale + shift); gsum accumulates the lane-sum of the
    radix-summed splits (padded lanes masked)."""
    h = pl.program_id(1)
    hw_t = x_ref.shape[-1]

    @pl.when(h == 0)
    def _init():
        gsum_ref[...] = jnp.zeros_like(gsum_ref)

    g = None
    for r in range(radix):                      # per-chunk ref slices bound live ranges
        lo, hi = r * c_out, (r + 1) * c_out
        xc = x_ref[0, lo:hi, :].astype(jnp.float32)
        yc = jnp.maximum(xc * scale_ref[0, lo:hi, :].astype(jnp.float32)
                         + shift_ref[0, lo:hi, :].astype(jnp.float32), 0.0)
        y_ref[0, lo:hi, :] = yc.astype(y_ref.dtype)
        g = yc if g is None else g + yc

    if hw_true % hw_t != 0:                     # static: lane padding exists
        lane = lax.broadcasted_iota(jnp.int32, (1, hw_t), 1) + h * hw_t
        g = jnp.where(lane < hw_true, g, 0.0)
    gsum_ref[...] = gsum_ref[...] + jnp.sum(g, axis=-1, keepdims=True)[None]


def _combine_bn_relu_ln_projin_kernel(c_out, radix, ln_eps, d0,
                                      x_ref, a_ref, bs_ref, bb_ref,
                                      lw_ref, lb_ref, w_ref, wb_ref,
                                      out_ref, pwa_ref, abc_ref):
    """K2: split-attention combine + BN1 + ReLU + channels_first LN + gnconv
    proj_in (split into pwa / abc outputs)."""
    comb = None
    for r in range(radix):
        lo, hi = r * c_out, (r + 1) * c_out
        term = (a_ref[0, lo:hi, :].astype(jnp.float32)
                * x_ref[0, lo:hi, :].astype(jnp.float32))
        comb = term if comb is None else comb + term
    o = jnp.maximum(comb * bs_ref[0].astype(jnp.float32)
                    + bb_ref[0].astype(jnp.float32), 0.0)            # (C, hw)
    out_ref[0, :, :] = o.astype(out_ref.dtype)

    # channels_first LayerNorm over channels (sublane axis), one-pass stats.
    u = jnp.mean(o, axis=0, keepdims=True)
    var = jnp.maximum(jnp.mean(o * o, axis=0, keepdims=True) - u * u, 0.0)
    nrm = ((o - u) * lax.rsqrt(var + ln_eps) * lw_ref[0].astype(jnp.float32)
           + lb_ref[0].astype(jnp.float32))

    # gnconv proj_in (1x1 conv == channel matmul), bf16 operands, f32 accumulate.
    f = (jnp.dot(w_ref[...], nrm.astype(jnp.bfloat16),
                 preferred_element_type=jnp.float32)
         + wb_ref[...].astype(jnp.float32))                          # (2C, hw)
    pwa_ref[0, :, :] = f[:d0, :].astype(pwa_ref.dtype)
    abc_ref[0, :, :] = f[d0:, :].astype(abc_ref.dtype)


def _make_gnconv_gate_kernel(dims, scale):
    """K3: gnconv gating chain: (pwa*dw0*s) -> 1x1 -> *dw1*s -> ... -> proj_out -> *gamma."""
    order = len(dims)
    d0 = dims[0]

    def kernel(*refs):
        pwa_ref, dw_ref = refs[0], refs[1]
        idx = 2
        pw = []
        for _ in range(order - 1):
            pw.append((refs[idx], refs[idx + 1]))
            idx += 2
        wo_ref, bo_ref, gamma_ref = refs[idx], refs[idx + 1], refs[idx + 2]
        out_ref = refs[idx + 3]

        t = (pwa_ref[0, :, :].astype(jnp.float32)
             * (dw_ref[0, 0:d0, :].astype(jnp.float32) * scale))
        off = d0
        for i, (w_ref, b_ref) in enumerate(pw):
            t = (jnp.dot(w_ref[...], t.astype(jnp.bfloat16),
                         preferred_element_type=jnp.float32)
                 + b_ref[...].astype(jnp.float32))
            di = dims[i + 1]
            t = t * (dw_ref[0, off:off + di, :].astype(jnp.float32) * scale)
            off += di
        g = (jnp.dot(wo_ref[...], t.astype(jnp.bfloat16),
                     preferred_element_type=jnp.float32)
             + bo_ref[...].astype(jnp.float32))
        out_ref[0, :, :] = (g * gamma_ref[...].astype(jnp.float32)).astype(out_ref.dtype)

    return kernel


def _residual_relu_kernel(has_sc_bn, *refs):
    """K4: out = relu(out_branch + gnconv_scaled + shortcut[*scale + shift])."""
    if has_sc_bn:
        o_ref, g_ref, s_ref, ss_ref, sb_ref, out_ref = refs
        s = (s_ref[...].astype(jnp.float32) * ss_ref[...].astype(jnp.float32)
             + sb_ref[...].astype(jnp.float32))
    else:
        o_ref, g_ref, s_ref, out_ref = refs
        s = s_ref[...].astype(jnp.float32)
    out_ref[...] = jnp.maximum(
        o_ref[...].astype(jnp.float32) + g_ref[...].astype(jnp.float32) + s,
        0.0).astype(out_ref.dtype)


# ----------------------------- helpers ----------------------------------------

def _vmem_budget_bytes():
    """~75% of this chip's physical VMEM (v7x 64 MiB vs v5e/v6e 128 MiB)."""
    try:
        cap = int(getattr(pltpu.get_tpu_info(), 'vmem_capacity_bytes', 0))
    except Exception:
        cap = 0
    if cap <= 0:
        cap = 64 * 1024 * 1024
    return (cap * 3) // 4


def _pick_hw_tile(hw_pad, per_lane_bytes, fixed_bytes, budget_bytes):
    """Largest multiple-of-128 tile dividing hw_pad whose double-buffered
    footprint (per-lane bytes of the heaviest stage + resident weights) fits."""
    avail = max(budget_bytes - fixed_bytes, per_lane_bytes * 128)
    max_lanes = max(128, (avail // per_lane_bytes) // 128 * 128)
    tile, t = 128, 256
    while t <= hw_pad and t <= max_lanes:
        if hw_pad % t == 0:
            tile = t
        t += 128
    return tile


def _compiler_params(h_sem, vmem_limit):
    return pltpu.CompilerParams(
        dimension_semantics=("parallel", h_sem),
        vmem_limit_bytes=int(vmem_limit))


def _pad_lanes(x3, hw_pad):
    hw = x3.shape[-1]
    if hw == hw_pad:
        return x3
    return jnp.pad(x3, ((0, 0), (0, 0), (0, hw_pad - hw)))


def conv2d(x, w, b=None, *, stride=1, padding=0, groups=1):
    out = lax.conv_general_dilated(
        x, w, window_strides=(stride, stride),
        padding=((padding, padding), (padding, padding)),
        feature_group_count=groups,
        dimension_numbers=('NCHW', 'OIHW', 'NCHW'))
    if b is not None:
        out = out + b[None, :, None, None]
    return out


def bn_scale_shift(bn, eps=1e-5):
    scale = bn['weight'] * lax.rsqrt(bn['running_var'] + eps)
    shift = bn['bias'] - bn['running_mean'] * scale
    return scale, shift


def _rsoftmax(x, radix, cardinality):
    b = x.shape[0]
    if radix > 1:
        x = x.reshape(b, cardinality, radix, -1)
        x = jnp.swapaxes(x, 1, 2)
        x = jax.nn.softmax(x, axis=1)
        return x.reshape(b, -1)
    return jax.nn.sigmoid(x)


# ----------------------------- block forward (Pallas) -------------------------

def block_forward_pallas(params, x, *, hw_tile=None):
    stride, radix = params['stride'], params['radix']
    groups, order = params['groups'], params['order']
    C = params['ln_w'].shape[0]
    Cr = C * radix
    N = x.shape[0]

    dims = [C // (2 ** i) for i in range(order)]
    dims.reverse()
    d0, S = dims[0], sum(dims)

    # SplitAttention grouped 3x3 conv (XLA, default precision).
    y = conv2d(x, params['sa_conv_w'], None, stride=stride, padding=1,
               groups=groups * radix)
    _, _, Ho, Wo = y.shape
    HW = Ho * Wo
    HWp = -(-HW // 128) * 128               # lane axis padded to a multiple of 128

    # --- footprint-aware tile selection (per perf review) ---
    ib = jnp.dtype(_INTER_DTYPE).itemsize
    fb = jnp.dtype(jnp.float32).itemsize
    per_lane = 2 * max(
        Cr * fb + Cr * ib,                  # K1: y in (f32) + y_bn out (bf16)
        Cr * ib + (C + d0 + S) * ib,        # K2: y_bn in + out/pwa/abc outs
        (d0 + S) * ib + C * ib,             # K3: pwa/dw in + gn out
        2 * C * ib + 2 * C * fb)            # K4: out_flat/gn in + shortcut in + out
    fixed = 2 * fb * (2 * C * C + C * C
                      + sum(dims[i] * dims[i + 1] for i in range(order - 1))) \
        + (2 << 20)
    budget = _vmem_budget_bytes()
    hw_t = int(hw_tile) if hw_tile is not None else _pick_hw_tile(
        HWp, per_lane, fixed, budget)
    assert hw_t % 128 == 0 and HWp % hw_t == 0, (hw_t, HWp)
    grid = (N, HWp // hw_t)
    cp_par = _compiler_params("parallel", budget)
    cp_arb = _compiler_params("arbitrary", budget)   # K1: gap accumulator on h

    # --- K1: BN0 + ReLU + radix-sum + in-kernel GAP partial sum ---
    y3 = _pad_lanes(y.reshape(N, Cr, HW), HWp)
    s0, b0 = bn_scale_shift(params['bn0'])
    y_bn, gsum = pl.pallas_call(
        functools.partial(_bn_relu_radixsum_kernel, C, radix, HW),
        out_shape=(jax.ShapeDtypeStruct((N, Cr, HWp), _INTER_DTYPE),
                   jax.ShapeDtypeStruct((N, C, 1), jnp.float32)),
        grid_spec=pltpu.PrefetchScalarGridSpec(
            num_scalar_prefetch=0, grid=grid,
            in_specs=[pl.BlockSpec((1, Cr, hw_t), lambda n, h: (n, 0, h)),
                      pl.BlockSpec((1, Cr, 1), lambda n, h: (0, 0, 0)),
                      pl.BlockSpec((1, Cr, 1), lambda n, h: (0, 0, 0))],
            out_specs=(pl.BlockSpec((1, Cr, hw_t), lambda n, h: (n, 0, h)),
                       pl.BlockSpec((1, C, 1), lambda n, h: (n, 0, 0)))),
        compiler_params=cp_arb,
    )(y3, s0.reshape(1, Cr, 1), b0.reshape(1, Cr, 1))

    # Squeeze-excite path on (N, C, 1, 1): fc1 -> BN -> ReLU -> fc2 -> rSoftMax (plain JAX).
    gap = (gsum[:, :, 0] / float(HW)).reshape(N, C, 1, 1)
    g1 = conv2d(gap, params['fc1_w'], params['fc1_b'], groups=groups)
    s1, sh1 = bn_scale_shift(params['bn1_sa'])
    g1 = jax.nn.relu(g1 * s1[None, :, None, None] + sh1[None, :, None, None])
    att = conv2d(g1, params['fc2_w'], params['fc2_b'], groups=groups)
    a = _rsoftmax(att.reshape(N, -1), radix, groups)                   # (N, Cr)

    # --- K2: combine + BN1 + ReLU + LayerNorm(cf) + gnconv proj_in (split outs) ---
    sb1, bb1 = bn_scale_shift(params['bn1'])
    w_in = params['gn_proj_in_w'][:, :, 0, 0].astype(jnp.bfloat16)     # (2C, C)
    out_flat, pwa, abc = pl.pallas_call(
        functools.partial(_combine_bn_relu_ln_projin_kernel, C, radix,
                          params['ln_eps'], d0),
        out_shape=(jax.ShapeDtypeStruct((N, C, HWp), _INTER_DTYPE),
                   jax.ShapeDtypeStruct((N, d0, HWp), _INTER_DTYPE),
                   jax.ShapeDtypeStruct((N, S, HWp), _INTER_DTYPE)),
        grid_spec=pltpu.PrefetchScalarGridSpec(
            num_scalar_prefetch=0, grid=grid,
            in_specs=[pl.BlockSpec((1, Cr, hw_t), lambda n, h: (n, 0, h)),
                      pl.BlockSpec((1, Cr, 1), lambda n, h: (n, 0, 0)),
                      pl.BlockSpec((1, C, 1), lambda n, h: (0, 0, 0)),
                      pl.BlockSpec((1, C, 1), lambda n, h: (0, 0, 0)),
                      pl.BlockSpec((1, C, 1), lambda n, h: (0, 0, 0)),
                      pl.BlockSpec((1, C, 1), lambda n, h: (0, 0, 0)),
                      pl.BlockSpec((2 * C, C), lambda n, h: (0, 0)),
                      pl.BlockSpec((2 * C, 1), lambda n, h: (0, 0))],
            out_specs=(pl.BlockSpec((1, C, hw_t), lambda n, h: (n, 0, h)),
                       pl.BlockSpec((1, d0, hw_t), lambda n, h: (n, 0, h)),
                       pl.BlockSpec((1, S, hw_t), lambda n, h: (n, 0, h)))),
        compiler_params=cp_par,
    )(y_bn, a.reshape(N, Cr, 1),
      sb1.reshape(1, C, 1), bb1.reshape(1, C, 1),
      params['ln_w'].reshape(1, C, 1), params['ln_b'].reshape(1, C, 1),
      w_in, params['gn_proj_in_b'].reshape(2 * C, 1))

    # Depthwise 7x7 conv (XLA, bf16); gn_scale folded into K3 instead of here.
    abc_sp = abc[:, :, :HW].reshape(N, S, Ho, Wo)
    dw_abc = conv2d(abc_sp, params['gn_dw_w'].astype(_INTER_DTYPE),
                    params['gn_dw_b'].astype(_INTER_DTYPE), padding=3, groups=S)
    dw3 = _pad_lanes(dw_abc.reshape(N, S, HW), HWp)

    # --- K3: gnconv gating chain ---
    gate_kernel = _make_gnconv_gate_kernel(tuple(dims), float(params['gn_scale']))
    gate_in_specs = [pl.BlockSpec((1, d0, hw_t), lambda n, h: (n, 0, h)),
                     pl.BlockSpec((1, S, hw_t), lambda n, h: (n, 0, h))]
    gate_args = [pwa, dw3]
    for i in range(order - 1):
        wi = params['gn_pw_w'][i][:, :, 0, 0].astype(jnp.bfloat16)
        bi = params['gn_pw_b'][i].reshape(-1, 1)
        gate_in_specs += [pl.BlockSpec(wi.shape, lambda n, h: (0, 0)),
                          pl.BlockSpec(bi.shape, lambda n, h: (0, 0))]
        gate_args += [wi, bi]
    wo = params['gn_proj_out_w'][:, :, 0, 0].astype(jnp.bfloat16)
    bo = params['gn_proj_out_b'].reshape(C, 1)
    gamma = params['gamma'].reshape(C, 1)
    gate_in_specs += [pl.BlockSpec(wo.shape, lambda n, h: (0, 0)),
                      pl.BlockSpec(bo.shape, lambda n, h: (0, 0)),
                      pl.BlockSpec(gamma.shape, lambda n, h: (0, 0))]
    gate_args += [wo, bo, gamma]

    gn = pl.pallas_call(
        gate_kernel,
        out_shape=jax.ShapeDtypeStruct((N, C, HWp), _INTER_DTYPE),
        grid_spec=pltpu.PrefetchScalarGridSpec(
            num_scalar_prefetch=0, grid=grid,
            in_specs=gate_in_specs,
            out_specs=pl.BlockSpec((1, C, hw_t), lambda n, h: (n, 0, h))),
        compiler_params=cp_par,
    )(*gate_args)

    # --- K4: shortcut (+ folded BN only if it exists) + residual + ReLU ---
    if stride != 1 or x.shape[1] != C:
        xs = conv2d(x, params['sc_conv_w'], None, stride=stride, padding=0)
        scs, scb = bn_scale_shift(params['sc_bn'])
        sc_args = [scs.reshape(1, C, 1), scb.reshape(1, C, 1)]
        sc_specs = [pl.BlockSpec((1, C, 1), lambda n, h: (0, 0, 0)),
                    pl.BlockSpec((1, C, 1), lambda n, h: (0, 0, 0))]
        has_sc_bn = True
    else:
        xs = x
        sc_args, sc_specs, has_sc_bn = [], [], False
    xs3 = _pad_lanes(xs.reshape(N, C, HW), HWp)

    out_p = pl.pallas_call(
        functools.partial(_residual_relu_kernel, has_sc_bn),
        out_shape=jax.ShapeDtypeStruct((N, C, HWp), x.dtype),
        grid_spec=pltpu.PrefetchScalarGridSpec(
            num_scalar_prefetch=0, grid=grid,
            in_specs=[pl.BlockSpec((1, C, hw_t), lambda n, h: (n, 0, h)),
                      pl.BlockSpec((1, C, hw_t), lambda n, h: (n, 0, h)),
                      pl.BlockSpec((1, C, hw_t), lambda n, h: (n, 0, h))] + sc_specs,
            out_specs=pl.BlockSpec((1, C, hw_t), lambda n, h: (n, 0, h))),
        compiler_params=cp_par,
    )(out_flat, gn, xs3, *sc_args)

    return out_p[:, :, :HW].reshape(N, C, Ho, Wo)


# ----------------------------- pure-JAX reference ------------------------------

def block_forward_reference(params, x):
    stride, radix = params['stride'], params['radix']
    groups, order = params['groups'], params['order']
    C = params['ln_w'].shape[0]

    y = conv2d(x, params['sa_conv_w'], None, stride=stride, padding=1,
               groups=groups * radix)
    s0, b0 = bn_scale_shift(params['bn0'])
    y = jax.nn.relu(y * s0[None, :, None, None] + b0[None, :, None, None])
    splits = [y[:, r * C:(r + 1) * C] for r in range(radix)]
    gap = sum(splits) if radix > 1 else y
    gap = gap.mean(axis=(2, 3), keepdims=True)
    g1 = conv2d(gap, params['fc1_w'], params['fc1_b'], groups=groups)
    s1, sh1 = bn_scale_shift(params['bn1_sa'])
    g1 = jax.nn.relu(g1 * s1[None, :, None, None] + sh1[None, :, None, None])
    att = conv2d(g1, params['fc2_w'], params['fc2_b'], groups=groups)
    a = _rsoftmax(att.reshape(att.shape[0], -1), radix, groups)
    if radix > 1:
        attns = [a[:, r * C:(r + 1) * C, None, None] for r in range(radix)]
        sa = sum(at * sp for at, sp in zip(attns, splits))
    else:
        sa = a[:, :, None, None] * y

    sb1, bb1 = bn_scale_shift(params['bn1'])
    out = jax.nn.relu(sa * sb1[None, :, None, None] + bb1[None, :, None, None])

    u = out.mean(axis=1, keepdims=True)
    s = ((out - u) ** 2).mean(axis=1, keepdims=True)
    nrm = (out - u) / jnp.sqrt(s + params['ln_eps'])
    nrm = params['ln_w'][None, :, None, None] * nrm + params['ln_b'][None, :, None, None]

    dims = [C // (2 ** i) for i in range(order)]
    dims.reverse()
    fused = conv2d(nrm, params['gn_proj_in_w'], params['gn_proj_in_b'])
    pwa, abc = fused[:, :dims[0]], fused[:, dims[0]:]
    dw_abc = conv2d(abc, params['gn_dw_w'], params['gn_dw_b'], padding=3,
                    groups=sum(dims)) * params['gn_scale']
    t = pwa * dw_abc[:, :dims[0]]
    off = dims[0]
    for i in range(order - 1):
        t = conv2d(t, params['gn_pw_w'][i], params['gn_pw_b'][i])
        t = t * dw_abc[:, off:off + dims[i + 1]]
        off += dims[i + 1]
    g = conv2d(t, params['gn_proj_out_w'], params['gn_proj_out_b'])
    g = g * params['gamma'][None, :, None, None]

    if stride != 1 or x.shape[1] != C:
        sc = conv2d(x, params['sc_conv_w'], None, stride=stride, padding=0)
        scs, scb = bn_scale_shift(params['sc_bn'])
        sc = sc * scs[None, :, None, None] + scb[None, :, None, None]
    else:
        sc = x
    return jax.nn.relu(out + g + sc)


# ----------------------------- parameter init ----------------------------------

def init_block_params(key, in_ch, out_ch, *, stride=1, order=3, radix=2,
                      groups=1, reduction_factor=4):
    keys = iter(jax.random.split(key, 64))

    def nrm(shape, scale=0.1):
        return (scale * jax.random.normal(next(keys), shape)).astype(jnp.float32)

    def bn(c):
        return dict(weight=1.0 + nrm((c,), 0.05),
                    bias=nrm((c,), 0.05),
                    running_mean=nrm((c,), 0.1),
                    running_var=0.5 + jax.random.uniform(next(keys), (c,),
                                                         dtype=jnp.float32))

    inter = max(in_ch * radix // reduction_factor, 32)
    dims = [out_ch // (2 ** i) for i in range(order)]
    dims.reverse()
    p = dict(
        stride=stride, radix=radix, groups=groups, order=order,
        sa_conv_w=nrm((out_ch * radix, in_ch // (groups * radix), 3, 3), 0.15),
        bn0=bn(out_ch * radix),
        fc1_w=nrm((inter, out_ch // groups, 1, 1), 0.15),
        fc1_b=nrm((inter,), 0.05),
        bn1_sa=bn(inter),
        fc2_w=nrm((out_ch * radix, inter // groups, 1, 1), 0.15),
        fc2_b=nrm((out_ch * radix,), 0.05),
        bn1=bn(out_ch),
        ln_w=1.0 + nrm((out_ch,), 0.05),
        ln_b=nrm((out_ch,), 0.05),
        ln_eps=1e-6,
        gn_proj_in_w=nrm((2 * out_ch, out_ch, 1, 1), 0.15),
        gn_proj_in_b=nrm((2 * out_ch,), 0.05),
        gn_dw_w=nrm((sum(dims), 1, 7, 7), 0.1),
        gn_dw_b=nrm((sum(dims),), 0.05),
        gn_pw_w=[nrm((dims[i + 1], dims[i], 1, 1), 0.15) for i in range(order - 1)],
        gn_pw_b=[nrm((dims[i + 1],), 0.05) for i in range(order - 1)],
        gn_proj_out_w=nrm((out_ch, out_ch, 1, 1), 0.15),
        gn_proj_out_b=nrm((out_ch,), 0.05),
        gn_scale=1.0,
        # Module init would be layer_scale_init_value * ones; random "trained"
        # values keep the gnconv branch numerically visible in the self-check.
        gamma=0.5 + nrm((out_ch,), 0.1),
    )
    if stride != 1 or in_ch != out_ch:
        p['sc_conv_w'] = nrm((out_ch, in_ch, 1, 1), 0.15)
        p['sc_bn'] = bn(out_ch)
    return p


# ----------------------------- main / test -------------------------------------

if __name__ == "__main__":
    key = jax.random.PRNGKey(0)
    configs = [
        # (a) 128-aligned HW, identity shortcut; forced 128-lane tiles so the
        #     h axis has >1 step (exercises pipelining + the K1 gap accumulator).
        dict(N=2, Cin=32, Cout=32, H=16, W=16, stride=1, hw_tile=128),
        # (b) HW=7*7=49 -> padded to 128 lanes, downsample + conv shortcut path.
        dict(N=2, Cin=16, Cout=32, H=14, W=14, stride=2, hw_tile=None),
    ]
    # Tolerance: intermediates are stored bf16 and the in-kernel 1x1 matmuls run
    # single-pass bf16 on the MXU (f32 accumulate), vs an f32 XLA reference.
    atol = rtol = 3e-2
    for cfg in configs:
        key, kp, kx = jax.random.split(key, 3)
        params = init_block_params(kp, cfg['Cin'], cfg['Cout'], stride=cfg['stride'],
                                   order=3, radix=2, groups=1)
        x = jax.random.normal(kx, (cfg['N'], cfg['Cin'], cfg['H'], cfg['W']),
                              dtype=jnp.float32)
        y = jax.block_until_ready(block_forward_pallas(params, x,
                                                       hw_tile=cfg['hw_tile']))
        y_ref = jax.block_until_ready(block_forward_reference(params, x))
        assert y.shape == y_ref.shape, (y.shape, y_ref.shape)
        max_err = float(jnp.max(jnp.abs(y - y_ref)))
        assert jnp.allclose(y, y_ref, atol=atol, rtol=rtol), \
            f"mismatch for {cfg}: max|err|={max_err}"
    print("KERNEL_OK")
</pallas_src>

<mosaic_0001>
module attributes {stable_mosaic.version = 11 : i64} {
  func.func @_bn_relu_radixsum_kernel(%arg0: i32, %arg1: i32, %arg2: memref<1x64x128xf32, #tpu.memory_space<vmem>>, %arg3: memref<1x64x1xf32, #tpu.memory_space<vmem>>, %arg4: memref<1x64x1xf32, #tpu.memory_space<vmem>>, %arg5: memref<1x64x128xbf16, #tpu.memory_space<vmem>>, %arg6: memref<1x32x1xf32, #tpu.memory_space<vmem>>) attributes {dimension_semantics = [#tpu.dimension_semantics<parallel>, #tpu.dimension_semantics<arbitrary>], iteration_bounds = array<i64: 2, 2>, scalar_prefetch = 0 : i64, scratch_operands = 0 : i64, tpu.core_type = #tpu.core_type<tc>, window_params = [{transform_indices = @transform_0, window_bounds = array<i64: 1, 64, 128>}, {pipeline_mode = #tpu.pipeline_mode<synchronous>, transform_indices = @transform_1, window_bounds = array<i64: 1, 64, 1>}, {pipeline_mode = #tpu.pipeline_mode<synchronous>, transform_indices = @transform_2, window_bounds = array<i64: 1, 64, 1>}, {transform_indices = @transform_3, window_bounds = array<i64: 1, 64, 128>}, {transform_indices = @transform_4, window_bounds = array<i64: 1, 32, 1>}]} {
    %c0_i32 = arith.constant 0 : i32
    %0 = arith.cmpi eq, %arg1, %c0_i32 : i32
    %1 = arith.extui %0 : i1 to i32
    %c0_i32_0 = arith.constant 0 : i32
    %2 = arith.cmpi ne, %1, %c0_i32_0 : i32
    scf.if %2 {
      %cst_31 = arith.constant 0.000000e+00 : f32
      %42 = vector.broadcast %cst_31 : f32 to vector<1x32x1xf32>
      %c0_32 = arith.constant 0 : index
      %c0_33 = arith.constant 0 : index
      %c0_34 = arith.constant 0 : index
      %43 = vector.load %arg6[%c0_32, %c0_33, %c0_34] : memref<1x32x1xf32, #tpu.memory_space<vmem>>, vector<1x32x1xf32>
      tpu.vector_store %arg6[%c0_32, %c0_33, %c0_34], %42 {strides = array<i32>} : memref<1x32x1xf32, #tpu.memory_space<vmem>>, vector<1x32x1xf32>,
    } else {
    }
    %c0 = arith.constant 0 : index
    %c0_1 = arith.constant 0 : index
    %c0_2 = arith.constant 0 : index
    %3 = vector.load %arg2[%c0, %c0_1, %c0_2] : memref<1x64x128xf32, #tpu.memory_space<vmem>>, vector<1x32x128xf32>
    %4 = vector.shape_cast %3 : vector<1x32x128xf32> to vector<32x128xf32>
    %c0_3 = arith.constant 0 : index
    %c0_4 = arith.constant 0 : index
    %c0_5 = arith.constant 0 : index
    %5 = vector.load %arg3[%c0_3, %c0_4, %c0_5] : memref<1x64x1xf32, #tpu.memory_space<vmem>>, vector<1x32x1xf32>
    %6 = vector.shape_cast %5 : vector<1x32x1xf32> to vector<32x1xf32>
    %7 = vector.broadcast %6 : vector<32x1xf32> to vector<32x128xf32>
    %8 = arith.mulf %4, %7 : vector<32x128xf32>
    %c0_6 = arith.constant 0 : index
    %c0_7 = arith.constant 0 : index
    %c0_8 = arith.constant 0 : index
    %9 = vector.load %arg4[%c0_6, %c0_7, %c0_8] : memref<1x64x1xf32, #tpu.memory_space<vmem>>, vector<1x32x1xf32>
    %10 = vector.shape_cast %9 : vector<1x32x1xf32> to vector<32x1xf32>
    %11 = vector.broadcast %10 : vector<32x1xf32> to vector<32x128xf32>
    %12 = arith.addf %8, %11 : vector<32x128xf32>
    %cst = arith.constant 0.000000e+00 : f32
    %13 = vector.broadcast %cst : f32 to vector<32x128xf32>
    %14 = arith.maximumf %12, %13 : vector<32x128xf32>
    %15 = arith.truncf %14 : vector<32x128xf32> to vector<32x128xbf16>
    %c0_9 = arith.constant 0 : index
    %c0_10 = arith.constant 0 : index
    %c0_11 = arith.constant 0 : index
    %16 = vector.load %arg5[%c0_9, %c0_10, %c0_11] : memref<1x64x128xbf16, #tpu.memory_space<vmem>>, vector<1x32x128xbf16>
    %17 = vector.shape_cast %16 : vector<1x32x128xbf16> to vector<32x128xbf16>
    %18 = vector.shape_cast %15 : vector<32x128xbf16> to vector<1x32x128xbf16>
    tpu.vector_store %arg5[%c0_9, %c0_10, %c0_11], %18 {strides = array<i32>} : memref<1x64x128xbf16, #tpu.memory_space<vmem>>, vector<1x32x128xbf16>,
    %c0_12 = arith.constant 0 : index
    %c32 = arith.constant 32 : index
    %c0_13 = arith.constant 0 : index
    %19 = vector.load %arg2[%c0_12, %c32, %c0_13] : memref<1x64x128xf32, #tpu.memory_space<vmem>>, vector<1x32x128xf32>
    %20 = vector.shape_cast %19 : vector<1x32x128xf32> to vector<32x128xf32>
    %c0_14 = arith.constant 0 : index
    %c32_15 = arith.constant 32 : index
    %c0_16 = arith.constant 0 : index
    %21 = vector.load %arg3[%c0_14, %c32_15, %c0_16] : memref<1x64x1xf32, #tpu.memory_space<vmem>>, vector<1x32x1xf32>
    %22 = vector.shape_cast %21 : vector<1x32x1xf32> to vector<32x1xf32>
    %23 = vector.broadcast %22 : vector<32x1xf32> to vector<32x128xf32>
    %24 = arith.mulf %20, %23 : vector<32x128xf32>
    %c0_17 = arith.constant 0 : index
    %c32_18 = arith.constant 32 : index
    %c0_19 = arith.constant 0 : index
    %25 = vector.load %arg4[%c0_17, %c32_18, %c0_19] : memref<1x64x1xf32, #tpu.memory_space<vmem>>, vector<1x32x1xf32>
    %26 = vector.shape_cast %25 : vector<1x32x1xf32> to vector<32x1xf32>
    %27 = vector.broadcast %26 : vector<32x1xf32> to vector<32x128xf32>
    %28 = arith.addf %24, %27 : vector<32x128xf32>
    %cst_20 = arith.constant 0.000000e+00 : f32
    %29 = vector.broadcast %cst_20 : f32 to vector<32x128xf32>
    %30 = arith.maximumf %28, %29 : vector<32x128xf32>
    %31 = arith.truncf %30 : vector<32x128xf32> to vector<32x128xbf16>
    %c0_21 = arith.constant 0 : index
    %c32_22 = arith.constant 32 : index
    %c0_23 = arith.constant 0 : index
    %32 = vector.load %arg5[%c0_21, %c32_22, %c0_23] : memref<1x64x128xbf16, #tpu.memory_space<vmem>>, vector<1x32x128xbf16>
    %33 = vector.shape_cast %32 : vector<1x32x128xbf16> to vector<32x128xbf16>
    %34 = vector.shape_cast %31 : vector<32x128xbf16> to vector<1x32x128xbf16>
    tpu.vector_store %arg5[%c0_21, %c32_22, %c0_23], %34 {strides = array<i32>} : memref<1x64x128xbf16, #tpu.memory_space<vmem>>, vector<1x32x128xbf16>,
    %35 = arith.addf %14, %30 : vector<32x128xf32>
    %c0_24 = arith.constant 0 : index
    %c0_25 = arith.constant 0 : index
    %c0_26 = arith.constant 0 : index
    %36 = vector.load %arg6[%c0_24, %c0_25, %c0_26] : memref<1x32x1xf32, #tpu.memory_space<vmem>>, vector<1x32x1xf32>
    %cst_27 = arith.constant dense<0.000000e+00> : vector<32xf32>
    %37 = vector.multi_reduction <add>, %35, %cst_27 [1] : vector<32x128xf32> to vector<32xf32>
    %38 = vector.shape_cast %37 : vector<32xf32> to vector<32x1xf32>
    %39 = vector.shape_cast %38 : vector<32x1xf32> to vector<1x32x1xf32>
    %40 = arith.addf %36, %39 : vector<1x32x1xf32>
    %c0_28 = arith.constant 0 : index
    %c0_29 = arith.constant 0 : index
    %c0_30 = arith.constant 0 : index
    %41 = vector.load %arg6[%c0_28, %c0_29, %c0_30] : memref<1x32x1xf32, #tpu.memory_space<vmem>>, vector<1x32x1xf32>
    tpu.vector_store %arg6[%c0_28, %c0_29, %c0_30], %40 {strides = array<i32>} : memref<1x32x1xf32, #tpu.memory_space<vmem>>, vector<1x32x1xf32>,
    return
  }
  func.func @transform_0(%arg0: i32, %arg1: i32) -> (i32, i32, i32) {
    %c0_i32 = arith.constant 0 : i32
    %c0_i32_0 = arith.constant 0 : i32
    return %arg0, %c0_i32, %arg1 : i32, i32, i32
  }
  func.func @transform_1(%arg0: i32, %arg1: i32) -> (i32, i32, i32) {
    %c0_i32 = arith.constant 0 : i32
    %c0_i32_0 = arith.constant 0 : i32
    %c0_i32_1 = arith.constant 0 : i32
    %c0_i32_2 = arith.constant 0 : i32
    return %c0_i32, %c0_i32_0, %c0_i32_1 : i32, i32, i32
  }
  func.func @transform_2(%arg0: i32, %arg1: i32) -> (i32, i32, i32) {
    %c0_i32 = arith.constant 0 : i32
    %c0_i32_0 = arith.constant 0 : i32
    %c0_i32_1 = arith.constant 0 : i32
    %c0_i32_2 = arith.constant 0 : i32
    return %c0_i32, %c0_i32_0, %c0_i32_1 : i32, i32, i32
  }
  func.func @transform_3(%arg0: i32, %arg1: i32) -> (i32, i32, i32) {
    %c0_i32 = arith.constant 0 : i32
    %c0_i32_0 = arith.constant 0 : i32
    return %arg0, %c0_i32, %arg1 : i32, i32, i32
  }
  func.func @transform_4(%arg0: i32, %arg1: i32) -> (i32, i32, i32) {
    %c0_i32 = arith.constant 0 : i32
    %c0_i32_0 = arith.constant 0 : i32
    %c0_i32_1 = arith.constant 0 : i32
    return %arg0, %c0_i32, %c0_i32_0 : i32, i32, i32
  }
}

</mosaic_0001>

<llo_original>
// kernel: tpu_custom_call.1
$region0: #{tpu_custom_call.1}
  #allocation0 [shape = 'u32[]', space=smem, size = 0x4, offset = 0x4, fixed_abs, tag = 'smem constant byte address 0x4 - core index']
  #allocation1 [shape = 'u32[144,128]{1,0:T(1,128)}', space=vmem, size = 0x12000, scoped, tag = 'internal scratch']
  %s0 = inlined_call_operand.hbm [shape: f32[2,64,256], index: 0, kind: input, shape index: {}]
  %s1 = inlined_call_operand.vmem [shape: f32[1,64,1], index: 1, kind: input, shape index: {}]
  %s2 = inlined_call_operand.vmem [shape: f32[1,64,1], index: 2, kind: input, shape index: {}]
  %s3 = inlined_call_operand.hbm [shape: bf16[2,64,256], index: 3, kind: output, shape index: {0}]
  %s4 = inlined_call_operand.vmem [shape: f32[2,32,1], index: 4, kind: output, shape index: {1}]
  %5 = xla_tuple %s3, %s4
  %s6 = sld [smem:[#allocation0]]
  $region61: #{tpu_custom_call.1} parent=0
    _
  %s8 = ssub.s32 1, %s6
  %s9 = scalar_select 0, %s8, %s6
  $region1: #{tpu_custom_call.1} parent=0
    #allocation2 [shape = 'u8[65536]{0}', space=vmem, size = 0x10000, scoped, tag = 'input window, operand 0']
    #allocation3 [shape = 's32[2]{0}', space=sflag, size = 0x8, scoped, tag = 'scoped memory for tpu_custom_call.1']
    #allocation4 [shape = 's32[2]{0}', space=sflag, size = 0x8, scoped, tag = 'scoped memory for tpu_custom_call.1']
    #allocation5 [shape = 'u8[32768]{0}', space=vmem, size = 0x8000, scoped, tag = 'output window, operand 0']
    %10 = vsyncpa [#allocation3], 0
    %s11 = scalar_lea.sflag [#allocation3], 1
    %12 = vsyncpa %s11, 0
    %13 = vsyncpa [#allocation4], 0
    %s14 = scalar_lea.sflag [#allocation4], 1
    %15 = vsyncpa %s14, 0
    loop: start=0, step=1, limit=6
    $region2: #{tpu_custom_call.1} parent=1 // loop_pre_header
      _
    $region3: #{tpu_custom_call.1} parent=1 // loop_header
      %s17 = sphi 0, %s21
      %p18 = scmp.ge.s32.totalorder %s17, 6
      %s24 = sphi 0, %s36
      %s25 = sphi 0, %s32
      %s26 = sphi 0, %s24
      %s27 = sphi 0, %s25
      %s28 = sphi 0, %s26
      %s29 = sphi 0, %s27
      %s41 = sphi 0, %s43
      %s44 = sphi 0, %s41
      %s45 = sphi 0, %s44
      %s61 = sphi 0, %s45
      %s65 = sphi 0, %s65
      %s67 = sphi 0, %s65
      %s68 = sphi 0, %s67
      %s82 = sphi 0, %s68
      %s86 = sphi 0, %s86
      %s88 = sphi 0, %s86
      %s89 = sphi 0, %s88
      %s103 = sphi 0, %s89
      %s111 = sphi 0, %s113
      %s114 = sphi 0, %s111
      %s115 = sphi 0, %s114
      %s131 = sphi 0, %s115
      %s137 = sphi 0, %s139
      %s140 = sphi 0, %s137
      %s141 = sphi 0, %s140
      %s157 = sphi 0, %s141
    $region4: #{tpu_custom_call.1} parent=1 // loop_header_branch
      %20 = sbr.rel (%p18) target = $region8
    $region5: #{tpu_custom_call.1} parent=1 // loop_body
      %s22 = ssub.s32 %s17, 1
      %s23 = ssub.s32 %s17, 2
      %s30 = sadd.s32 1, %s25
      %p31 = scmp.ge.s32.totalorder %s30, 2
      %s32 = scalar_select %p31, 0, %s30
      %s33 = sadd.s32 1, %s24
      %s34 = scalar_select %p31, %s33, %s24
      %p35 = scmp.ge.s32.totalorder %s34, 2
      %s36 = scalar_select %p35, 0, %s34
      %s37 = ssub.s32 %s24, %s36
      %s38 = ssub.s32 %s25, %s32
      %s39 = sor.u32 %s37, %s38
      %p40 = scmp.eq.s32.totalorder %s39, 0
      %s42 = sadd.s32 %s41, 1
      %s43 = scalar_select %p40, %s41, %s42
      %p46 = pneg %p40
      %p47 = scmp.eq.s32.totalorder %s17, 3
      %p48 = por %p46, %p47
      %p49 = scmp.ne.s32.totalorder %s41, %s44
      %p50 = scmp.eq.s32.totalorder %s17, 0
      %p51 = por %p49, %p50
      %p52 = scmp.ne.s32.totalorder %s41, %s44
      %p53 = scmp.eq.s32.totalorder %s22, 3
      %p54 = por %p52, %p53
      %p55 = scmp.ne.s32.totalorder %s44, %s45
      %p56 = scmp.eq.s32.totalorder %s22, 0
      %p57 = por %p55, %p56
      %p58 = scmp.ne.s32.totalorder %s44, %s45
      %p59 = scmp.eq.s32.totalorder %s23, 3
      %p60 = por %p58, %p59
      %p62 = scmp.ne.s32.totalorder %s45, %s61
      %p63 = scmp.eq.s32.totalorder %s23, 0
      %p64 = por %p62, %p63
      %s66 = sadd.s32 %s65, 1
      %p69 = scmp.eq.s32.totalorder %s17, 3
      %p70 = scmp.ne.s32.totalorder %s65, %s67
      %p71 = scmp.eq.s32.totalorder %s17, 0
      %p72 = por %p70, %p71
      %p73 = scmp.ne.s32.totalorder %s65, %s67
      %p74 = scmp.eq.s32.totalorder %s22, 3
      %p75 = por %p73, %p74
      %p76 = scmp.ne.s32.totalorder %s67, %s68
      %p77 = scmp.eq.s32.totalorder %s22, 0
      %p78 = por %p76, %p77
      %p79 = scmp.ne.s32.totalorder %s67, %s68
      %p80 = scmp.eq.s32.totalorder %s23, 3
      %p81 = por %p79, %p80
      %p83 = scmp.ne.s32.totalorder %s68, %s82
      %p84 = scmp.eq.s32.totalorder %s23, 0
      %p85 = por %p83, %p84
      %s87 = sadd.s32 %s86, 1
      %p90 = scmp.eq.s32.totalorder %s17, 3
      %p91 = scmp.ne.s32.totalorder %s86, %s88
      %p92 = scmp.eq.s32.totalorder %s17, 0
      %p93 = por %p91, %p92
      %p94 = scmp.ne.s32.totalorder %s86, %s88
      %p95 = scmp.eq.s32.totalorder %s22, 3
      %p96 = por %p94, %p95
      %p97 = scmp.ne.s32.totalorder %s88, %s89
      %p98 = scmp.eq.s32.totalorder %s22, 0
      %p99 = por %p97, %p98
      %p100 = scmp.ne.s32.totalorder %s88, %s89
      %p101 = scmp.eq.s32.totalorder %s23, 3
      %p102 = por %p100, %p101
      %p104 = scmp.ne.s32.totalorder %s89, %s103
      %p105 = scmp.eq.s32.totalorder %s23, 0
      %p106 = por %p104, %p105
      %s107 = ssub.s32 %s24, %s36
      %s108 = ssub.s32 %s25, %s32
      %s109 = sor.u32 %s107, %s108
      %p110 = scmp.eq.s32.totalorder %s109, 0
      %s112 = sadd.s32 %s111, 1
      %s113 = scalar_select %p110, %s111, %s112
      %p116 = pneg %p110
      %p117 = scmp.eq.s32.totalorder %s17, 3
      %p118 = por %p116, %p117
      %p119 = scmp.ne.s32.totalorder %s111, %s114
      %p120 = scmp.eq.s32.totalorder %s17, 0
      %p121 = por %p119, %p120
      %p122 = scmp.ne.s32.totalorder %s111, %s114
      %p123 = scmp.eq.s32.totalorder %s22, 3
      %p124 = por %p122, %p123
      %p125 = scmp.ne.s32.totalorder %s114, %s115
      %p126 = scmp.eq.s32.totalorder %s22, 0
      %p127 = por %p125, %p126
      %p128 = scmp.ne.s32.totalorder %s114, %s115
      %p129 = scmp.eq.s32.totalorder %s23, 3
      %p130 = por %p128, %p129
      %p132 = scmp.ne.s32.totalorder %s115, %s131
      %p133 = scmp.eq.s32.totalorder %s23, 0
      %p134 = por %p132, %p133
      %s135 = ssub.s32 %s24, %s36
      %p136 = scmp.eq.s32.totalorder %s135, 0
      %s138 = sadd.s32 %s137, 1
      %s139 = scalar_select %p136, %s137, %s138
      %p142 = pneg %p136
      %p143 = scmp.eq.s32.totalorder %s17, 3
      %p144 = por %p142, %p143
      %p145 = scmp.ne.s32.totalorder %s137, %s140
      %p146 = scmp.eq.s32.totalorder %s17, 0
      %p147 = por %p145, %p146
      %p148 = scmp.ne.s32.totalorder %s137, %s140
      %p149 = scmp.eq.s32.totalorder %s22, 3
      %p150 = por %p148, %p149
      %p151 = scmp.ne.s32.totalorder %s140, %s141
      %p152 = scmp.eq.s32.totalorder %s22, 0
      %p153 = por %p151, %p152
      %p154 = scmp.ne.s32.totalorder %s140, %s141
      %p155 = scmp.eq.s32.totalorder %s23, 3
      %p156 = por %p154, %p155
      %p158 = scmp.ne.s32.totalorder %s141, %s157
      %p159 = scmp.eq.s32.totalorder %s23, 0
      %p160 = por %p158, %p159
      %p161 = scmp.le.s32.totalorder 1, %s17
      %p162 = scmp.lt.s32.totalorder %s17, 5
      %p163 = pnand %p161, %p162
      %p164 = pneg %p163
      // Predicated region
      $region9: #{tpu_custom_call.1} parent=5 // pred_check
        _
      $region10: #{tpu_custom_call.1} parent=5 // pred_check_branch
        %166 = sbr.rel (%p163) target = $region12
      $region11: #{tpu_custom_call.1} parent=5 // pred_region
        %s167 = ssub.s32 %s17, 1
        // Predicated region
        $region13: #{tpu_custom_call.1} parent=11 // pred_check
          %p168 = pneg %p78
        $region14: #{tpu_custom_call.1} parent=11 // pred_check_branch
          %170 = sbr.rel (%p168) target = $region16
        $region15: #{tpu_custom_call.1} parent=11 // pred_region
          _
        $region16: #{tpu_custom_call.1} parent=11 // pred_fallthru
          _
        // Predicated region
        $region17: #{tpu_custom_call.1} parent=11 // pred_check
          %p171 = pneg %p99
        $region18: #{tpu_custom_call.1} parent=11 // pred_check_branch
          %173 = sbr.rel (%p171) target = $region20
        $region19: #{tpu_custom_call.1} parent=11 // pred_region
          _
        $region20: #{tpu_custom_call.1} parent=11 // pred_fallthru
          _
      $region12: #{tpu_custom_call.1} parent=5 // pred_fallthru
        _
      %p174 = scmp.lt.s32.totalorder %s17, 4
      // Predicated region
      $region21: #{tpu_custom_call.1} parent=5 // pred_check
        %p175 = pneg %p174
      $region22: #{tpu_custom_call.1} parent=5 // pred_check_branch
        %177 = sbr.rel (%p175) target = $region24
      $region23: #{tpu_custom_call.1} parent=5 // pred_region
        // Predicated region
        $region25: #{tpu_custom_call.1} parent=23 // pred_check
          %p178 = pneg %p51
        $region26: #{tpu_custom_call.1} parent=23 // pred_check_branch
          %180 = sbr.rel (%p178) target = $region28
        $region27: #{tpu_custom_call.1} parent=23 // pred_region
          %s181 = sand.u32 %s41, 1
          %s182 = scalar_lea.sflag [#allocation3], %s181
          %s183 = sand.u32 %s41, 1
          %s184 = smul.addr %s183, 64
          %s185 = scalar_lea.vmem [#allocation2], %s184
          %s187 = ssub.s32 1024, 1024
          %188 = vsyncadd %s182, %s187
          %s189 = smul.addr %s24, 16
          %s190 = sadd.s32 %s25, %s189
          %s191 = smul.addr %s190, 128
          %s192 = scalar_lea.hbm %s0, %s191
          %s193 = sshll.u32 %s185, 4
          %s194 = int_to_ptr.vmem [resolvable:$true] %s193
          %199 = dma.hbm_to_vmem [thread:$0]  %s192, 1024, %s194, %s182, 256, 128, 8
        $region28: #{tpu_custom_call.1} parent=23 // pred_fallthru
          _
      $region24: #{tpu_custom_call.1} parent=5 // pred_fallthru
        _
      %p200 = scmp.le.s32.totalorder 1, %s17
      %p201 = scmp.lt.s32.totalorder %s17, 5
      %p202 = pnand %p200, %p201
      %p203 = pneg %p202
      // Predicated region
      $region29: #{tpu_custom_call.1} parent=5 // pred_check
        _
      $region30: #{tpu_custom_call.1} parent=5 // pred_check_branch
        %205 = sbr.rel (%p202) target = $region32
      $region31: #{tpu_custom_call.1} parent=5 // pred_region
        %s206 = ssub.s32 %s17, 1
        %s207 = sand.u32 %s44, 1
        %s208 = scalar_lea.sflag [#allocation3], %s207
        %s209 = sand.u32 %s44, 1
        %s210 = smul.addr %s209, 64
        %s211 = scalar_lea.vmem [#allocation2], %s210
        // Predicated region
        $region33: #{tpu_custom_call.1} parent=31 // pred_check
          %p212 = pneg %p57
        $region34: #{tpu_custom_call.1} parent=31 // pred_check_branch
          %214 = sbr.rel (%p212) target = $region36
        $region35: #{tpu_custom_call.1} parent=31 // pred_region
          %215 = dma.done %s208, 1024
        $region36: #{tpu_custom_call.1} parent=31 // pred_fallthru
          _
        %s216 = sand.u32 %s44, 1
        %s217 = scalar_lea.sflag [#allocation3], %s216
        %s218 = sand.u32 %s44, 1
        %s219 = smul.addr %s218, 64
        %s220 = scalar_lea.vmem [#allocation2], %s219
        %p221 = pneg %p57
        %p222 = pneg %p54
        %p223 = pneg %p78
        %p224 = pneg %p75
        %p225 = pneg %p99
        %p226 = pneg %p96
        %p227 = pneg %p127
        %p228 = pneg %p124
        %s229 = sand.u32 %s114, 1
        %s230 = scalar_lea.sflag [#allocation4], %s229
        %s231 = sand.u32 %s114, 1
        %s232 = smul.addr %s231, 32
        %s233 = scalar_lea.vmem [#allocation5], %s232
        %p234 = pneg %p153
        %p235 = pneg %p150
        %p236 = scmp.lt.s32.totalorder %s26, 1
        %s237 = scalar_select %p236, %s26, 1
        %s238 = smul.addr %s237, 4
        %s239 = smul.addr %s238, 8
        %s240 = scalar_lea.vmem %s4, %s239
        %p241 = scmp.lt.s32.totalorder %s26, 1
        %s242 = scalar_select %p241, %s26, 1
        %s243 = smul.addr %s242, 4
        %s244 = smul.addr %s243, 8
        %s245 = scalar_lea.vmem %s4, %s244
        %p246 = scmp.eq.s32.totalorder %s27, 0
        // Predicated region
        $region37: #{tpu_custom_call.1} parent=31 // pred_check
          %p247 = pneg %p246
        $region38: #{tpu_custom_call.1} parent=31 // pred_check_branch
          %249 = sbr.rel (%p247) target = $region40
        $region39: #{tpu_custom_call.1} parent=31 // pred_region
          %vm250 = vcmask 7168
          %251 = vst.msk [vmem:[%s245] sm:$0xff] %vm250, 0.0
          %252 = vst.msk [vmem:[%s245 + $0x8] sm:$0xff] %vm250, 0.0
          %253 = vst.msk [vmem:[%s245 + $0x10] sm:$0xff] %vm250, 0.0
          %254 = vst.msk [vmem:[%s245 + $0x18] sm:$0xff] %vm250, 0.0
        $region40: #{tpu_custom_call.1} parent=31 // pred_fallthru
          _
        %v255 = vld [vmem:[%s211] sm:$0xff]
        %v256 = vld [vmem:[%s211 + $0x8] sm:$0xff]
        %v257 = vld [vmem:[%s211 + $0x10] sm:$0xff]
        %v258 = vld [vmem:[%s211 + $0x18] sm:$0xff]
        %v259 = vld [vmem:[%s1] sm:$0xff]
        %v260 = vld [vmem:[%s1 + $0x8] sm:$0xff]
        %v261 = vld [vmem:[%s1 + $0x10] sm:$0xff]
        %v262 = vld [vmem:[%s1 + $0x18] sm:$0xff]
        %264 = vset.pattern.permute.xlu0 0
        %265 = vperm.xlu0 %264, %v259
        %v266 = vpop.permute.xlu0 %265
        %269 = vset.pattern.permute.xlu0 0
        %270 = vperm.xlu0 %269, %v260
        %v271 = vpop.permute.xlu0 %270
        %274 = vset.pattern.permute.xlu0 0
        %275 = vperm.xlu0 %274, %v261
        %v276 = vpop.permute.xlu0 %275
        %279 = vset.pattern.permute.xlu0 0
        %280 = vperm.xlu0 %279, %v262
        %v281 = vpop.permute.xlu0 %280
        %v283 = vmul.f32 %v255, %v266
        %v284 = vmul.f32 %v256, %v271
        %v285 = vmul.f32 %v257, %v276
        %v286 = vmul.f32 %v258, %v281
        %v287 = vld [vmem:[%s2] sm:$0xff]
        %v288 = vld [vmem:[%s2 + $0x8] sm:$0xff]
        %v289 = vld [vmem:[%s2 + $0x10] sm:$0xff]
        %v290 = vld [vmem:[%s2 + $0x18] sm:$0xff]
        %292 = vset.pattern.permute.xlu0 0
        %293 = vperm.xlu0 %292, %v287
        %v294 = vpop.permute.xlu0 %293
        %297 = vset.pattern.permute.xlu0 0
        %298 = vperm.xlu0 %297, %v288
        %v299 = vpop.permute.xlu0 %298
        %302 = vset.pattern.permute.xlu0 0
        %303 = vperm.xlu0 %302, %v289
        %v304 = vpop.permute.xlu0 %303
        %307 = vset.pattern.permute.xlu0 0
        %308 = vperm.xlu0 %307, %v290
        %v309 = vpop.permute.xlu0 %308
        %v311 = vadd.f32 %v283, %v294
        %v312 = vadd.f32 %v284, %v299
        %v313 = vadd.f32 %v285, %v304
        %v314 = vadd.f32 %v286, %v309
        %v315 = vmax.f32 %v311, 0.0
        %v316 = vmax.f32 %v312, 0.0
        %v317 = vmax.f32 %v313, 0.0
        %v318 = vmax.f32 %v314, 0.0
        %v319 = vpack.c.bf16 %v316, %v315
        %v320 = vpack.c.bf16 %v318, %v317
        %v323 = vunpack.c.l.b16 %v319
        %v324 = vunpack.c.h.b16 %v319
        %v325 = vunpack.c.l.b16 %v320
        %v326 = vunpack.c.h.b16 %v320
        %v327 = vpack.c.b16 %v323, %v323
        %v328 = vpack.c.b16 %v324, %v324
        %v329 = vpack.c.b16 %v325, %v325
        %v330 = vpack.c.b16 %v326, %v326
        %335 = vst [vmem:[%s233] sm:$0xf] %v327
        %336 = vst [vmem:[%s233 + $0x4] sm:$0xf] %v328
        %337 = vst [vmem:[%s233 + $0x8] sm:$0xf] %v329
        %338 = vst [vmem:[%s233 + $0xc] sm:$0xf] %v330
        %v339 = vld [vmem:[%s211 + $0x20] sm:$0xff]
        %v340 = vld [vmem:[%s211 + $0x28] sm:$0xff]
        %v341 = vld [vmem:[%s211 + $0x30] sm:$0xff]
        %v342 = vld [vmem:[%s211 + $0x38] sm:$0xff]
        %v343 = vld [vmem:[%s1 + $0x20] sm:$0xff]
        %v344 = vld [vmem:[%s1 + $0x28] sm:$0xff]
        %v345 = vld [vmem:[%s1 + $0x30] sm:$0xff]
        %v346 = vld [vmem:[%s1 + $0x38] sm:$0xff]
        %348 = vset.pattern.permute.xlu0 0
        %349 = vperm.xlu0 %348, %v343
        %v350 = vpop.permute.xlu0 %349
        %353 = vset.pattern.permute.xlu0 0
        %354 = vperm.xlu0 %353, %v344
        %v355 = vpop.permute.xlu0 %354
        %358 = vset.pattern.permute.xlu0 0
        %359 = vperm.xlu0 %358, %v345
        %v360 = vpop.permute.xlu0 %359
        %363 = vset.pattern.permute.xlu0 0
        %364 = vperm.xlu0 %363, %v346
        %v365 = vpop.permute.xlu0 %364
        %v367 = vmul.f32 %v339, %v350
        %v368 = vmul.f32 %v340, %v355
        %v369 = vmul.f32 %v341, %v360
        %v370 = vmul.f32 %v342, %v365
        %v371 = vld [vmem:[%s2 + $0x20] sm:$0xff]
        %v372 = vld [vmem:[%s2 + $0x28] sm:$0xff]
        %v373 = vld [vmem:[%s2 + $0x30] sm:$0xff]
        %v374 = vld [vmem:[%s2 + $0x38] sm:$0xff]
        %376 = vset.pattern.permute.xlu0 0
        %377 = vperm.xlu0 %376, %v371
        %v378 = vpop.permute.xlu0 %377
        %381 = vset.pattern.permute.xlu0 0
        %382 = vperm.xlu0 %381, %v372
        %v383 = vpop.permute.xlu0 %382
        %386 = vset.pattern.permute.xlu0 0
        %387 = vperm.xlu0 %386, %v373
        %v388 = vpop.permute.xlu0 %387
        %391 = vset.pattern.permute.xlu0 0
        %392 = vperm.xlu0 %391, %v374
        %v393 = vpop.permute.xlu0 %392
        %v395 = vadd.f32 %v367, %v378
        %v396 = vadd.f32 %v368, %v383
        %v397 = vadd.f32 %v369, %v388
        %v398 = vadd.f32 %v370, %v393
        %v399 = vmax.f32 %v395, 0.0
        %v400 = vmax.f32 %v396, 0.0
        %v401 = vmax.f32 %v397, 0.0
        %v402 = vmax.f32 %v398, 0.0
        %v403 = vpack.c.bf16 %v400, %v399
        %v404 = vpack.c.bf16 %v402, %v401
        %v407 = vunpack.c.l.b16 %v403
        %v408 = vunpack.c.h.b16 %v403
        %v409 = vunpack.c.l.b16 %v404
        %v410 = vunpack.c.h.b16 %v404
        %v411 = vpack.c.b16 %v407, %v407
        %v412 = vpack.c.b16 %v408, %v408
        %v413 = vpack.c.b16 %v409, %v409
        %v414 = vpack.c.b16 %v410, %v410
        %419 = vst [vmem:[%s233 + $0x10] sm:$0xf] %v411
        %420 = vst [vmem:[%s233 + $0x14] sm:$0xf] %v412
        %421 = vst [vmem:[%s233 + $0x18] sm:$0xf] %v413
        %422 = vst [vmem:[%s233 + $0x1c] sm:$0xf] %v414
        %v423 = vadd.f32 %v315, %v399
        %v424 = vadd.f32 %v316, %v400
        %v425 = vadd.f32 %v317, %v401
        %v426 = vadd.f32 %v318, %v402
        %v427 = vld [vmem:[%s245] sm:$0xff]
        %v428 = vld [vmem:[%s245 + $0x8] sm:$0xff]
        %v429 = vld [vmem:[%s245 + $0x10] sm:$0xff]
        %v430 = vld [vmem:[%s245 + $0x18] sm:$0xff]
        %431 = vadd.xlane.f32.xlu0 %v423
        %v432 = vpop.xlane.xlu0 %431
        %433 = vadd.xlane.f32.xlu0 %v424
        %v434 = vpop.xlane.xlu0 %433
        %435 = vadd.xlane.f32.xlu0 %v425
        %v436 = vpop.xlane.xlu0 %435
        %437 = vadd.xlane.f32.xlu0 %v426
        %v438 = vpop.xlane.xlu0 %437
        %v439 = vadd.f32 %v427, %v432
        %v440 = vadd.f32 %v428, %v434
        %v441 = vadd.f32 %v429, %v436
        %v442 = vadd.f32 %v430, %v438
        %vm443 = vcmask 7168
        %444 = vst.msk [vmem:[%s245] sm:$0xff] %vm443, %v439
        %445 = vst.msk [vmem:[%s245 + $0x8] sm:$0xff] %vm443, %v440
        %446 = vst.msk [vmem:[%s245 + $0x10] sm:$0xff] %vm443, %v441
        %447 = vst.msk [vmem:[%s245 + $0x18] sm:$0xff] %vm443, %v442
        %s448 = sand.u32 %s114, 1
        %s449 = scalar_lea.sflag [#allocation4], %s448
        %s450 = sand.u32 %s114, 1
        %s451 = smul.addr %s450, 32
        %s452 = scalar_lea.vmem [#allocation5], %s451
        %p453 = scmp.lt.s32.totalorder %s26, 1
        %s454 = scalar_select %p453, %s26, 1
        %s455 = smul.addr %s454, 4
        %s456 = smul.addr %s455, 8
        %s457 = scalar_lea.vmem %s4, %s456
        // Predicated region
        $region41: #{tpu_custom_call.1} parent=31 // pred_check
          %p458 = pneg %p124
        $region42: #{tpu_custom_call.1} parent=31 // pred_check_branch
          %460 = sbr.rel (%p458) target = $region44
        $region43: #{tpu_custom_call.1} parent=31 // pred_region
          %s462 = ssub.s32 512, 512
          %463 = vsyncadd %s449, %s462
          %s464 = smul.addr %s26, 16
          %s465 = sadd.s32 %s27, %s464
          %s466 = smul.addr %s465, 64
          %s467 = scalar_lea.hbm %s3, %s466
          %s468 = sshll.u32 %s452, 4
          %s469 = int_to_ptr.vmem [resolvable:$true] %s468
          %474 = dma.vmem_to_hbm [thread:$0]  %s469, 512, %s467, %s449, 64, 128, 4
        $region44: #{tpu_custom_call.1} parent=31 // pred_fallthru
          _
        // Predicated region
        $region45: #{tpu_custom_call.1} parent=31 // pred_check
          %p475 = pneg %p150
        $region46: #{tpu_custom_call.1} parent=31 // pred_check_branch
          %477 = sbr.rel (%p475) target = $region48
        $region47: #{tpu_custom_call.1} parent=31 // pred_region
          _
        $region48: #{tpu_custom_call.1} parent=31 // pred_fallthru
          _
      $region32: #{tpu_custom_call.1} parent=5 // pred_fallthru
        _
      %p478 = scmp.le.s32.totalorder 2, %s17
      // Predicated region
      $region49: #{tpu_custom_call.1} parent=5 // pred_check
        %p479 = pneg %p478
      $region50: #{tpu_custom_call.1} parent=5 // pred_check_branch
        %481 = sbr.rel (%p479) target = $region52
      $region51: #{tpu_custom_call.1} parent=5 // pred_region
        %s482 = ssub.s32 %s17, 2
        // Predicated region
        $region53: #{tpu_custom_call.1} parent=51 // pred_check
          %p483 = pneg %p130
        $region54: #{tpu_custom_call.1} parent=51 // pred_check_branch
          %485 = sbr.rel (%p483) target = $region56
        $region55: #{tpu_custom_call.1} parent=51 // pred_region
          %s486 = sand.u32 %s115, 1
          %s487 = scalar_lea.sflag [#allocation4], %s486
          %s488 = sand.u32 %s115, 1
          %s489 = smul.addr %s488, 32
          %s490 = scalar_lea.vmem [#allocation5], %s489
          %491 = dma.done %s487, 512
        $region56: #{tpu_custom_call.1} parent=51 // pred_fallthru
          _
        // Predicated region
        $region57: #{tpu_custom_call.1} parent=51 // pred_check
          %p492 = pneg %p156
        $region58: #{tpu_custom_call.1} parent=51 // pred_check_branch
          %494 = sbr.rel (%p492) target = $region60
        $region59: #{tpu_custom_call.1} parent=51 // pred_region
          %p495 = scmp.lt.s32.totalorder %s28, 1
          %s496 = scalar_select %p495, %s28, 1
          %s497 = smul.addr %s496, 4
          %s498 = smul.addr %s497, 8
          %s499 = scalar_lea.vmem %s4, %s498
        $region60: #{tpu_custom_call.1} parent=51 // pred_fallthru
          _
      $region52: #{tpu_custom_call.1} parent=5 // pred_fallthru
        _
    $region6: #{tpu_custom_call.1} parent=1 // loop_footer
      %s21 = sadd.s32 1, %s17
    $region7: #{tpu_custom_call.1} parent=1 // loop_footer_branch
      %16 = sbr.rel target = $region3
    $region8: #{tpu_custom_call.1} parent=1 // loop_exit
      _
    %500 = vsyncpa [#allocation3], 1
    %s501 = scalar_lea.sflag [#allocation3], 1
    %502 = vsyncpa %s501, 1
    %503 = vsyncpa [#allocation4], 1
    %s504 = scalar_lea.sflag [#allocation4], 1
    %505 = vsyncpa %s504, 1

</llo_original>
